<compile_context>
chip_gen: v7x
topology: tpu7x:2x2x1
jax: 0.10.0
libtpu: 0.0.40
codegen_flags: <defaults>
</compile_context>

<pallas_src>
import jax
import jax.numpy as jnp
from jax.experimental import pallas as pl
from jax.experimental.pallas import tpu as pltpu

_HIDDEN = 128
_LANE = 128
_SUBLANE = 8


def _round_up(x, m):
    return ((x + m - 1) // m) * m


def _fast_mlp_kernel(x_ref, w1_ref, b1_ref, w2_ref, b2_ref, o_ref, acc_ref):
    # x_ref:  (TB, TK)      bf16   VMEM (streamed, double-buffered)
    # w1_ref: (TK, 128)     bf16   VMEM (streamed along K)
    # b1_ref: (1, 128)      f32    VMEM (resident)
    # w2_ref: (128, C_pad)  bf16   VMEM (resident)
    # b2_ref: (1, C_pad)    f32    VMEM (resident)
    # o_ref:  (TB, C_pad)   f32    VMEM (written only on last K step)
    # acc_ref:(TB, 128)     f32    VMEM scratch accumulator
    k = pl.program_id(1)

    @pl.when(k == 0)
    def _():
        acc_ref[...] = jnp.zeros_like(acc_ref)

    # First layer: accumulate x_tile @ W1_tile on the MXU in f32.
    acc_ref[...] += jnp.dot(x_ref[...], w1_ref[...],
                            preferred_element_type=jnp.float32)

    @pl.when(k == pl.num_programs(1) - 1)
    def _():
        h = jnp.maximum(acc_ref[...] + b1_ref[...], 0.0)          # bias + ReLU (VPU)
        out = jnp.dot(h.astype(w2_ref.dtype), w2_ref[...],
                      preferred_element_type=jnp.float32) + b2_ref[...]
        o_ref[...] = out.astype(o_ref.dtype)


def fast_mlp_forward(x_nchw, w1, b1, w2, b2, *, batch_tile=None, k_tile=512):
    """x_nchw: (B, C, H, W). w1: (D_in, 128) bf16, b1: (1, 128) f32,
    w2: (128, num_classes) bf16, b2: (1, num_classes) f32.
    Returns f32 logits of shape (B, num_classes)."""
    B = x_nchw.shape[0]
    x_flat = x_nchw.reshape(B, -1)               # same row-major flatten as nn.Flatten
    d_in = x_flat.shape[1]
    hidden = w1.shape[1]
    num_classes = w2.shape[1]
    assert hidden == _HIDDEN

    compute_dtype = w1.dtype                     # bf16 MXU inputs, f32 accumulation
    x_flat = x_flat.astype(compute_dtype)

    # ---- lane/sublane-friendly padding & tiling -----------------------------
    c_pad = _round_up(num_classes, _LANE)        # lane-dense output (>= 128 wide)
    tk = k_tile if d_in >= k_tile else _round_up(d_in, _LANE)
    d_pad = _round_up(d_in, tk)
    if batch_tile is None:
        batch_tile = 256 if B >= 256 else _round_up(max(B, 1), _SUBLANE)
    tb = _round_up(batch_tile, _SUBLANE)
    b_pad = _round_up(max(B, 1), tb)

    x_p = jnp.pad(x_flat, ((0, b_pad - B), (0, d_pad - d_in)))
    w1_p = jnp.pad(w1, ((0, d_pad - d_in), (0, 0)))                       # zero rows: no-op
    w2_p = jnp.pad(w2, ((0, 0), (0, c_pad - num_classes)))                # zero logits, sliced off
    b1_p = b1.reshape(1, hidden).astype(jnp.float32)
    b2_p = jnp.pad(b2.reshape(1, num_classes).astype(jnp.float32),
                   ((0, 0), (0, c_pad - num_classes)))

    grid = (b_pad // tb, d_pad // tk)

    def _nbytes(a):
        return a.size * a.dtype.itemsize

    cost = pl.CostEstimate(
        flops=2 * b_pad * d_pad * hidden + 2 * b_pad * hidden * c_pad,
        transcendentals=0,
        bytes_accessed=(_nbytes(x_p) + _nbytes(w1_p) + _nbytes(w2_p)
                        + _nbytes(b1_p) + _nbytes(b2_p) + b_pad * c_pad * 4),
    )

    out_p = pl.pallas_call(
        _fast_mlp_kernel,
        out_shape=jax.ShapeDtypeStruct((b_pad, c_pad), jnp.float32),
        grid_spec=pltpu.PrefetchScalarGridSpec(
            num_scalar_prefetch=0,
            grid=grid,
            in_specs=[
                pl.BlockSpec((tb, tk), lambda i, k: (i, k)),          # x tile
                pl.BlockSpec((tk, hidden), lambda i, k: (k, 0)),      # W1 tile
                pl.BlockSpec((1, hidden), lambda i, k: (0, 0)),       # b1 (resident)
                pl.BlockSpec((hidden, c_pad), lambda i, k: (0, 0)),   # W2 (resident)
                pl.BlockSpec((1, c_pad), lambda i, k: (0, 0)),        # b2 (resident)
            ],
            out_specs=pl.BlockSpec((tb, c_pad), lambda i, k: (i, 0)),
            scratch_shapes=[pltpu.VMEM((tb, hidden), jnp.float32)],
        ),
        compiler_params=pltpu.CompilerParams(
            dimension_semantics=("parallel", "arbitrary")),
        cost_estimate=cost,
    )(x_p, w1_p, b1_p, w2_p, b2_p)

    return out_p[:B, :num_classes]


def init_params(key, input_size, num_classes, hidden=_HIDDEN):
    """Params mimicking nn.Linear's uniform(-1/sqrt(fan_in), 1/sqrt(fan_in)).
    Weights stored (D_in, D_out) (transposed vs PyTorch) and cast to bf16 once."""
    k1, k2, k3, k4 = jax.random.split(key, 4)
    bound1 = 1.0 / jnp.sqrt(input_size)
    bound2 = 1.0 / jnp.sqrt(hidden)
    w1 = jax.random.uniform(k1, (input_size, hidden), jnp.float32,
                            -bound1, bound1).astype(jnp.bfloat16)
    b1 = jax.random.uniform(k2, (1, hidden), jnp.float32, -bound1, bound1)
    w2 = jax.random.uniform(k3, (hidden, num_classes), jnp.float32,
                            -bound2, bound2).astype(jnp.bfloat16)
    b2 = jax.random.uniform(k4, (1, num_classes), jnp.float32, -bound2, bound2)
    return w1, b1, w2, b2


if __name__ == "__main__":
    key = jax.random.PRNGKey(0)
    kx, kp = jax.random.split(key)

    # Small NCHW input: batch=2, channels=4, spatial=16x16 -> input_size=1024
    B, C, H, W = 2, 4, 16, 16
    input_size = C * H * W
    num_classes = 10

    x = jax.random.normal(kx, (B, C, H, W), jnp.float32)
    w1, b1, w2, b2 = init_params(kp, input_size, num_classes)

    out = fast_mlp_forward(x, w1, b1, w2, b2)
    out = jax.block_until_ready(out)

    # Plain-JAX reference mirroring the kernel's bf16-in / f32-accumulate math.
    x_flat = x.reshape(B, -1).astype(jnp.bfloat16)
    h = jnp.maximum(jnp.dot(x_flat, w1, preferred_element_type=jnp.float32) + b1, 0.0)
    ref = jnp.dot(h.astype(jnp.bfloat16), w2, preferred_element_type=jnp.float32) + b2

    assert out.shape == (B, num_classes)
    assert out.dtype == jnp.float32
    assert jnp.allclose(out, ref, atol=1e-2, rtol=1e-2)

    print("KERNEL_OK")
</pallas_src>

<mosaic_0001>
module attributes {stable_mosaic.version = 11 : i64} {
  func.func @_fast_mlp_kernel(%arg0: i32, %arg1: i32, %arg2: memref<8x512xbf16, #tpu.memory_space<vmem>>, %arg3: memref<512x128xbf16, #tpu.memory_space<vmem>>, %arg4: memref<1x128xf32, #tpu.memory_space<vmem>>, %arg5: memref<128x128xbf16, #tpu.memory_space<vmem>>, %arg6: memref<1x128xf32, #tpu.memory_space<vmem>>, %arg7: memref<8x128xf32, #tpu.memory_space<vmem>>, %arg8: memref<8x128xf32, #tpu.memory_space<vmem>>) attributes {dimension_semantics = [#tpu.dimension_semantics<parallel>, #tpu.dimension_semantics<arbitrary>], iteration_bounds = array<i64: 1, 2>, scalar_prefetch = 0 : i64, scratch_operands = 1 : i64, tpu.core_type = #tpu.core_type<tc>, window_params = [{transform_indices = @transform_0, window_bounds = array<i64: 8, 512>}, {transform_indices = @transform_1, window_bounds = array<i64: 512, 128>}, {pipeline_mode = #tpu.pipeline_mode<synchronous>, transform_indices = @transform_2, window_bounds = array<i64: 1, 128>}, {pipeline_mode = #tpu.pipeline_mode<synchronous>, transform_indices = @transform_3, window_bounds = array<i64: 128, 128>}, {pipeline_mode = #tpu.pipeline_mode<synchronous>, transform_indices = @transform_4, window_bounds = array<i64: 1, 128>}, {transform_indices = @transform_5, window_bounds = array<i64: 8, 128>}]} {
    %c0_i32 = arith.constant 0 : i32
    %0 = arith.cmpi eq, %arg1, %c0_i32 : i32
    %1 = arith.extui %0 : i1 to i32
    %c0_i32_0 = arith.constant 0 : i32
    %2 = arith.cmpi ne, %1, %c0_i32_0 : i32
    scf.if %2 {
      %cst_9 = arith.constant 0.000000e+00 : f32
      %12 = vector.broadcast %cst_9 : f32 to vector<8x128xf32>
      %c0_10 = arith.constant 0 : index
      %c0_11 = arith.constant 0 : index
      %13 = vector.load %arg8[%c0_10, %c0_11] : memref<8x128xf32, #tpu.memory_space<vmem>>, vector<8x128xf32>
      tpu.vector_store %arg8[%c0_10, %c0_11], %12 {strides = array<i32>} : memref<8x128xf32, #tpu.memory_space<vmem>>, vector<8x128xf32>,
    } else {
    }
    %c0 = arith.constant 0 : index
    %c0_1 = arith.constant 0 : index
    %3 = vector.load %arg8[%c0, %c0_1] : memref<8x128xf32, #tpu.memory_space<vmem>>, vector<8x128xf32>
    %c0_2 = arith.constant 0 : index
    %c0_3 = arith.constant 0 : index
    %4 = vector.load %arg2[%c0_2, %c0_3] : memref<8x512xbf16, #tpu.memory_space<vmem>>, vector<8x512xbf16>
    %c0_4 = arith.constant 0 : index
    %c0_5 = arith.constant 0 : index
    %5 = vector.load %arg3[%c0_4, %c0_5] : memref<512x128xbf16, #tpu.memory_space<vmem>>, vector<512x128xbf16>
    %cst = arith.constant dense<0.000000e+00> : vector<8x128xf32>
    %6 = tpu.matmul %4, %5, %cst {dimension_numbers = #tpu.dot_dimension_numbers<[1], [0], [0], [1], [0, 0, 1, 1], [], []>} : vector<8x512xbf16>, vector<512x128xbf16>, vector<8x128xf32> -> vector<8x128xf32>
    %7 = arith.addf %3, %6 : vector<8x128xf32>
    %c0_6 = arith.constant 0 : index
    %c0_7 = arith.constant 0 : index
    %8 = vector.load %arg8[%c0_6, %c0_7] : memref<8x128xf32, #tpu.memory_space<vmem>>, vector<8x128xf32>
    tpu.vector_store %arg8[%c0_6, %c0_7], %7 {strides = array<i32>} : memref<8x128xf32, #tpu.memory_space<vmem>>, vector<8x128xf32>,
    %c1_i32 = arith.constant 1 : i32
    %9 = arith.cmpi eq, %arg1, %c1_i32 : i32
    %10 = arith.extui %9 : i1 to i32
    %c0_i32_8 = arith.constant 0 : i32
    %11 = arith.cmpi ne, %10, %c0_i32_8 : i32
    scf.if %11 {
      %c0_9 = arith.constant 0 : index
      %c0_10 = arith.constant 0 : index
      %12 = vector.load %arg8[%c0_9, %c0_10] : memref<8x128xf32, #tpu.memory_space<vmem>>, vector<8x128xf32>
      %c0_11 = arith.constant 0 : index
      %c0_12 = arith.constant 0 : index
      %13 = vector.load %arg4[%c0_11, %c0_12] : memref<1x128xf32, #tpu.memory_space<vmem>>, vector<1x128xf32>
      %14 = vector.broadcast %13 : vector<1x128xf32> to vector<8x128xf32>
      %15 = arith.addf %12, %14 : vector<8x128xf32>
      %cst_13 = arith.constant 0.000000e+00 : f32
      %16 = vector.broadcast %cst_13 : f32 to vector<8x128xf32>
      %17 = arith.maximumf %15, %16 : vector<8x128xf32>
      %18 = arith.truncf %17 : vector<8x128xf32> to vector<8x128xbf16>
      %c0_14 = arith.constant 0 : index
      %c0_15 = arith.constant 0 : index
      %19 = vector.load %arg5[%c0_14, %c0_15] : memref<128x128xbf16, #tpu.memory_space<vmem>>, vector<128x128xbf16>
      %cst_16 = arith.constant dense<0.000000e+00> : vector<8x128xf32>
      %20 = tpu.matmul %18, %19, %cst_16 {dimension_numbers = #tpu.dot_dimension_numbers<[1], [0], [0], [1], [0, 0, 1, 1], [], []>} : vector<8x128xbf16>, vector<128x128xbf16>, vector<8x128xf32> -> vector<8x128xf32>
      %c0_17 = arith.constant 0 : index
      %c0_18 = arith.constant 0 : index
      %21 = vector.load %arg6[%c0_17, %c0_18] : memref<1x128xf32, #tpu.memory_space<vmem>>, vector<1x128xf32>
      %22 = vector.broadcast %21 : vector<1x128xf32> to vector<8x128xf32>
      %23 = arith.addf %20, %22 : vector<8x128xf32>
      %c0_19 = arith.constant 0 : index
      %c0_20 = arith.constant 0 : index
      %24 = vector.load %arg7[%c0_19, %c0_20] : memref<8x128xf32, #tpu.memory_space<vmem>>, vector<8x128xf32>
      tpu.vector_store %arg7[%c0_19, %c0_20], %23 {strides = array<i32>} : memref<8x128xf32, #tpu.memory_space<vmem>>, vector<8x128xf32>,
    } else {
    }
    return
  }
  func.func @transform_0(%arg0: i32, %arg1: i32) -> (i32, i32) {
    %c0_i32 = arith.constant 0 : i32
    return %arg0, %arg1 : i32, i32
  }
  func.func @transform_1(%arg0: i32, %arg1: i32) -> (i32, i32) {
    %c0_i32 = arith.constant 0 : i32
    %c0_i32_0 = arith.constant 0 : i32
    return %arg1, %c0_i32 : i32, i32
  }
  func.func @transform_2(%arg0: i32, %arg1: i32) -> (i32, i32) {
    %c0_i32 = arith.constant 0 : i32
    %c0_i32_0 = arith.constant 0 : i32
    %c0_i32_1 = arith.constant 0 : i32
    return %c0_i32, %c0_i32_0 : i32, i32
  }
  func.func @transform_3(%arg0: i32, %arg1: i32) -> (i32, i32) {
    %c0_i32 = arith.constant 0 : i32
    %c0_i32_0 = arith.constant 0 : i32
    %c0_i32_1 = arith.constant 0 : i32
    return %c0_i32, %c0_i32_0 : i32, i32
  }
  func.func @transform_4(%arg0: i32, %arg1: i32) -> (i32, i32) {
    %c0_i32 = arith.constant 0 : i32
    %c0_i32_0 = arith.constant 0 : i32
    %c0_i32_1 = arith.constant 0 : i32
    return %c0_i32, %c0_i32_0 : i32, i32
  }
  func.func @transform_5(%arg0: i32, %arg1: i32) -> (i32, i32) {
    %c0_i32 = arith.constant 0 : i32
    %c0_i32_0 = arith.constant 0 : i32
    return %arg0, %c0_i32 : i32, i32
  }
}

</mosaic_0001>

<llo_original>
// kernel: tpu_custom_call.1
$region0: #{tpu_custom_call.1}
  #allocation0 [shape = 'u32[]', space=smem, size = 0x4, offset = 0x4, fixed_abs, tag = 'smem constant byte address 0x4 - core index']
  #allocation1 [shape = 'u32[144,128]{1,0:T(1,128)}', space=vmem, size = 0x12000, scoped, tag = 'internal scratch']
  #allocation2 [shape = 'f32[8,128]{1,0:T(8,128)}', space=vmem, size = 0x1000, scoped, tag = 'scratch operand']
  %s0 = inlined_call_operand.hbm [shape: bf16[8,1024], index: 0, kind: input, shape index: {}]
  %s1 = inlined_call_operand.hbm [shape: bf16[1024,128], index: 1, kind: input, shape index: {}]
  %s2 = inlined_call_operand.vmem [shape: f32[1,128], index: 2, kind: input, shape index: {}]
  %s3 = inlined_call_operand.hbm [shape: bf16[128,128], index: 3, kind: input, shape index: {}]
  %s4 = inlined_call_operand.vmem [shape: f32[1,128], index: 4, kind: input, shape index: {}]
  %s5 = inlined_call_operand.hbm [shape: f32[8,128], index: 5, kind: output, shape index: {}]
  %s6 = sld [smem:[#allocation0]]
  $region73: #{tpu_custom_call.1} parent=0
    _
  %s8 = ssub.s32 1, %s6
  %s9 = scalar_select 0, %s8, %s6
  $region1: #{tpu_custom_call.1} parent=0
    #allocation3 [shape = 'u8[16384]{0}', space=vmem, size = 0x4000, scoped, tag = 'input window, operand 0']
    #allocation4 [shape = 's32[2]{0}', space=sflag, size = 0x8, scoped, tag = 'scoped memory for tpu_custom_call.1']
    #allocation5 [shape = 's32[2]{0}', space=sflag, size = 0x8, scoped, tag = 'scoped memory for tpu_custom_call.1']
    #allocation6 [shape = 'u8[262144]{0}', space=vmem, size = 0x40000, scoped, tag = 'input window, operand 1']
    #allocation7 [shape = 's32[2]{0}', space=sflag, size = 0x8, scoped, tag = 'scoped memory for tpu_custom_call.1']
    #allocation8 [shape = 'u8[32768]{0}', space=vmem, size = 0x8000, scoped, tag = 'input window, operand 3, single buffered']
    #allocation9 [shape = 'u8[4096]{0}', space=vmem, size = 0x1000, scoped, tag = 'output window, operand 0, single buffered']
    %10 = vsyncpa [#allocation4], 0
    %s11 = scalar_lea.sflag [#allocation4], 1
    %12 = vsyncpa %s11, 0
    %13 = vsyncpa [#allocation7], 0
    %s14 = scalar_lea.sflag [#allocation7], 1
    %15 = vsyncpa %s14, 0
    %16 = vsyncpa [#allocation5], 0
    loop: start=0, step=1, limit=4
    $region2: #{tpu_custom_call.1} parent=1 // loop_pre_header
      _
    $region3: #{tpu_custom_call.1} parent=1 // loop_header
      %s18 = sphi 0, %s22
      %p19 = scmp.ge.s32.totalorder %s18, 4
      %s25 = sphi 0, %s37
      %s26 = sphi 0, %s33
      %s27 = sphi 0, %s25
      %s28 = sphi 0, %s26
      %s29 = sphi 0, %s27
      %s30 = sphi 0, %s28
      %s42 = sphi 0, %s44
      %s45 = sphi 0, %s42
      %s46 = sphi 0, %s45
      %s62 = sphi 0, %s46
      %s68 = sphi 0, %s70
      %s71 = sphi 0, %s68
      %s72 = sphi 0, %s71
      %s88 = sphi 0, %s72
      %s92 = sphi 0, %s92
      %s94 = sphi 0, %s92
      %s95 = sphi 0, %s94
      %s109 = sphi 0, %s95
      %s113 = sphi 0, %s113
      %s115 = sphi 0, %s113
      %s116 = sphi 0, %s115
      %s130 = sphi 0, %s116
      %s134 = sphi 0, %s134
      %s136 = sphi 0, %s134
      %s137 = sphi 0, %s136
      %s151 = sphi 0, %s137
      %s157 = sphi 0, %s159
      %s160 = sphi 0, %s157
      %s161 = sphi 0, %s160
      %s177 = sphi 0, %s161
    $region4: #{tpu_custom_call.1} parent=1 // loop_header_branch
      %21 = sbr.rel (%p19) target = $region8
    $region5: #{tpu_custom_call.1} parent=1 // loop_body
      %s23 = ssub.s32 %s18, 1
      %s24 = ssub.s32 %s18, 2
      %s31 = sadd.s32 1, %s26
      %p32 = scmp.ge.s32.totalorder %s31, 2
      %s33 = scalar_select %p32, 0, %s31
      %s34 = sadd.s32 1, %s25
      %s35 = scalar_select %p32, %s34, %s25
      %p36 = scmp.ge.s32.totalorder %s35, 1
      %s37 = scalar_select %p36, 0, %s35
      %s38 = ssub.s32 %s25, %s37
      %s39 = ssub.s32 %s26, %s33
      %s40 = sor.u32 %s38, %s39
      %p41 = scmp.eq.s32.totalorder %s40, 0
      %s43 = sadd.s32 %s42, 1
      %s44 = scalar_select %p41, %s42, %s43
      %p47 = pneg %p41
      %p48 = scmp.eq.s32.totalorder %s18, 1
      %p49 = por %p47, %p48
      %p50 = scmp.ne.s32.totalorder %s42, %s45
      %p51 = scmp.eq.s32.totalorder %s18, 0
      %p52 = por %p50, %p51
      %p53 = scmp.ne.s32.totalorder %s42, %s45
      %p54 = scmp.eq.s32.totalorder %s23, 1
      %p55 = por %p53, %p54
      %p56 = scmp.ne.s32.totalorder %s45, %s46
      %p57 = scmp.eq.s32.totalorder %s23, 0
      %p58 = por %p56, %p57
      %p59 = scmp.ne.s32.totalorder %s45, %s46
      %p60 = scmp.eq.s32.totalorder %s24, 1
      %p61 = por %p59, %p60
      %p63 = scmp.ne.s32.totalorder %s46, %s62
      %p64 = scmp.eq.s32.totalorder %s24, 0
      %p65 = por %p63, %p64
      %s66 = ssub.s32 %s26, %s33
      %p67 = scmp.eq.s32.totalorder %s66, 0
      %s69 = sadd.s32 %s68, 1
      %s70 = scalar_select %p67, %s68, %s69
      %p73 = pneg %p67
      %p74 = scmp.eq.s32.totalorder %s18, 1
      %p75 = por %p73, %p74
      %p76 = scmp.ne.s32.totalorder %s68, %s71
      %p77 = scmp.eq.s32.totalorder %s18, 0
      %p78 = por %p76, %p77
      %p79 = scmp.ne.s32.totalorder %s68, %s71
      %p80 = scmp.eq.s32.totalorder %s23, 1
      %p81 = por %p79, %p80
      %p82 = scmp.ne.s32.totalorder %s71, %s72
      %p83 = scmp.eq.s32.totalorder %s23, 0
      %p84 = por %p82, %p83
      %p85 = scmp.ne.s32.totalorder %s71, %s72
      %p86 = scmp.eq.s32.totalorder %s24, 1
      %p87 = por %p85, %p86
      %p89 = scmp.ne.s32.totalorder %s72, %s88
      %p90 = scmp.eq.s32.totalorder %s24, 0
      %p91 = por %p89, %p90
      %s93 = sadd.s32 %s92, 1
      %p96 = scmp.eq.s32.totalorder %s18, 1
      %p97 = scmp.ne.s32.totalorder %s92, %s94
      %p98 = scmp.eq.s32.totalorder %s18, 0
      %p99 = por %p97, %p98
      %p100 = scmp.ne.s32.totalorder %s92, %s94
      %p101 = scmp.eq.s32.totalorder %s23, 1
      %p102 = por %p100, %p101
      %p103 = scmp.ne.s32.totalorder %s94, %s95
      %p104 = scmp.eq.s32.totalorder %s23, 0
      %p105 = por %p103, %p104
      %p106 = scmp.ne.s32.totalorder %s94, %s95
      %p107 = scmp.eq.s32.totalorder %s24, 1
      %p108 = por %p106, %p107
      %p110 = scmp.ne.s32.totalorder %s95, %s109
      %p111 = scmp.eq.s32.totalorder %s24, 0
      %p112 = por %p110, %p111
      %s114 = sadd.s32 %s113, 1
      %p117 = scmp.eq.s32.totalorder %s18, 1
      %p118 = scmp.ne.s32.totalorder %s113, %s115
      %p119 = scmp.eq.s32.totalorder %s18, 0
      %p120 = por %p118, %p119
      %p121 = scmp.ne.s32.totalorder %s113, %s115
      %p122 = scmp.eq.s32.totalorder %s23, 1
      %p123 = por %p121, %p122
      %p124 = scmp.ne.s32.totalorder %s115, %s116
      %p125 = scmp.eq.s32.totalorder %s23, 0
      %p126 = por %p124, %p125
      %p127 = scmp.ne.s32.totalorder %s115, %s116
      %p128 = scmp.eq.s32.totalorder %s24, 1
      %p129 = por %p127, %p128
      %p131 = scmp.ne.s32.totalorder %s116, %s130
      %p132 = scmp.eq.s32.totalorder %s24, 0
      %p133 = por %p131, %p132
      %s135 = sadd.s32 %s134, 1
      %p138 = scmp.eq.s32.totalorder %s18, 1
      %p139 = scmp.ne.s32.totalorder %s134, %s136
      %p140 = scmp.eq.s32.totalorder %s18, 0
      %p141 = por %p139, %p140
      %p142 = scmp.ne.s32.totalorder %s134, %s136
      %p143 = scmp.eq.s32.totalorder %s23, 1
      %p144 = por %p142, %p143
      %p145 = scmp.ne.s32.totalorder %s136, %s137
      %p146 = scmp.eq.s32.totalorder %s23, 0
      %p147 = por %p145, %p146
      %p148 = scmp.ne.s32.totalorder %s136, %s137
      %p149 = scmp.eq.s32.totalorder %s24, 1
      %p150 = por %p148, %p149
      %p152 = scmp.ne.s32.totalorder %s137, %s151
      %p153 = scmp.eq.s32.totalorder %s24, 0
      %p154 = por %p152, %p153
      %s155 = ssub.s32 %s25, %s37
      %p156 = scmp.eq.s32.totalorder %s155, 0
      %s158 = sadd.s32 %s157, 1
      %s159 = scalar_select %p156, %s157, %s158
      %p162 = pneg %p156
      %p163 = scmp.eq.s32.totalorder %s18, 1
      %p164 = por %p162, %p163
      %p165 = scmp.ne.s32.totalorder %s157, %s160
      %p166 = scmp.eq.s32.totalorder %s18, 0
      %p167 = por %p165, %p166
      %p168 = scmp.ne.s32.totalorder %s157, %s160
      %p169 = scmp.eq.s32.totalorder %s23, 1
      %p170 = por %p168, %p169
      %p171 = scmp.ne.s32.totalorder %s160, %s161
      %p172 = scmp.eq.s32.totalorder %s23, 0
      %p173 = por %p171, %p172
      %p174 = scmp.ne.s32.totalorder %s160, %s161
      %p175 = scmp.eq.s32.totalorder %s24, 1
      %p176 = por %p174, %p175
      %p178 = scmp.ne.s32.totalorder %s161, %s177
      %p179 = scmp.eq.s32.totalorder %s24, 0
      %p180 = por %p178, %p179
      %p181 = scmp.le.s32.totalorder 1, %s18
      %p182 = scmp.lt.s32.totalorder %s18, 3
      %p183 = pnand %p181, %p182
      %p184 = pneg %p183
      // Predicated region
      $region9: #{tpu_custom_call.1} parent=5 // pred_check
        _
      $region10: #{tpu_custom_call.1} parent=5 // pred_check_branch
        %186 = sbr.rel (%p183) target = $region12
      $region11: #{tpu_custom_call.1} parent=5 // pred_region
        %s187 = ssub.s32 %s18, 1
        // Predicated region
        $region13: #{tpu_custom_call.1} parent=11 // pred_check
          %p188 = pneg %p105
        $region14: #{tpu_custom_call.1} parent=11 // pred_check_branch
          %190 = sbr.rel (%p188) target = $region16
        $region15: #{tpu_custom_call.1} parent=11 // pred_region
          _
        $region16: #{tpu_custom_call.1} parent=11 // pred_fallthru
          _
        // Predicated region
        $region17: #{tpu_custom_call.1} parent=11 // pred_check
          %p191 = pneg %p126
        $region18: #{tpu_custom_call.1} parent=11 // pred_check_branch
          %193 = sbr.rel (%p191) target = $region20
        $region19: #{tpu_custom_call.1} parent=11 // pred_region
          %s195 = ssub.s32 1024, 1024
          %196 = vsyncadd [#allocation7], %s195
          %s197 = sshll.u32 [#allocation8], 4
          %s198 = int_to_ptr.vmem [resolvable:$true] %s197
          %203 = dma.hbm_to_vmem [thread:$0]  %s3, 1024, %s198, [#allocation7], 64, 64, 4
        $region20: #{tpu_custom_call.1} parent=11 // pred_fallthru
          _
        // Predicated region
        $region21: #{tpu_custom_call.1} parent=11 // pred_check
          %p204 = pneg %p147
        $region22: #{tpu_custom_call.1} parent=11 // pred_check_branch
          %206 = sbr.rel (%p204) target = $region24
        $region23: #{tpu_custom_call.1} parent=11 // pred_region
          _
        $region24: #{tpu_custom_call.1} parent=11 // pred_fallthru
          _
      $region12: #{tpu_custom_call.1} parent=5 // pred_fallthru
        _
      %p207 = scmp.lt.s32.totalorder %s18, 2
      // Predicated region
      $region25: #{tpu_custom_call.1} parent=5 // pred_check
        %p208 = pneg %p207
      $region26: #{tpu_custom_call.1} parent=5 // pred_check_branch
        %210 = sbr.rel (%p208) target = $region28
      $region27: #{tpu_custom_call.1} parent=5 // pred_region
        // Predicated region
        $region29: #{tpu_custom_call.1} parent=27 // pred_check
          %p211 = pneg %p52
        $region30: #{tpu_custom_call.1} parent=27 // pred_check_branch
          %213 = sbr.rel (%p211) target = $region32
        $region31: #{tpu_custom_call.1} parent=27 // pred_region
          %s214 = sand.u32 %s42, 1
          %s215 = scalar_lea.sflag [#allocation4], %s214
          %s216 = sand.u32 %s42, 1
          %s217 = smul.addr %s216, 16
          %s218 = scalar_lea.vmem [#allocation3], %s217
          %s219 = smul.u32 4, %s26
          %s221 = ssub.s32 256, 256
          %222 = vsyncadd %s215, %s221
          %s223 = smul.addr %s25, 8
          %s224 = sadd.s32 %s219, %s223
          %s225 = smul.addr %s224, 64
          %s226 = scalar_lea.hbm %s0, %s225
          %s228 = sshll.u32 %s218, 4
          %s229 = int_to_ptr.vmem [resolvable:$true] %s228
          %231 = dma.hbm_to_vmem [thread:$0]  %s226, 256, %s229, %s215
        $region32: #{tpu_custom_call.1} parent=27 // pred_fallthru
          _
        // Predicated region
        $region33: #{tpu_custom_call.1} parent=27 // pred_check
          %p232 = pneg %p78
        $region34: #{tpu_custom_call.1} parent=27 // pred_check_branch
          %234 = sbr.rel (%p232) target = $region36
        $region35: #{tpu_custom_call.1} parent=27 // pred_region
          %s235 = sand.u32 %s18, 1
          %s236 = scalar_lea.sflag [#allocation7], %s235
          %s237 = sand.u32 %s68, 1
          %s238 = smul.addr %s237, 256
          %s239 = scalar_lea.vmem [#allocation6], %s238
          %s240 = smul.u32 64, %s26
          %s242 = ssub.s32 4096, 4096
          %243 = vsyncadd %s236, %s242
          %s244 = smul.addr %s240, 64
          %s245 = scalar_lea.hbm %s1, %s244
          %s246 = sshll.u32 %s239, 4
          %s247 = int_to_ptr.vmem [resolvable:$true] %s246
          %252 = dma.hbm_to_vmem [thread:$0]  %s245, 4096, %s247, %s236, 64, 64, 4
        $region36: #{tpu_custom_call.1} parent=27 // pred_fallthru
          _
      $region28: #{tpu_custom_call.1} parent=5 // pred_fallthru
        _
      %p253 = scmp.le.s32.totalorder 1, %s18
      %p254 = scmp.lt.s32.totalorder %s18, 3
      %p255 = pnand %p253, %p254
      %p256 = pneg %p255
      // Predicated region
      $region37: #{tpu_custom_call.1} parent=5 // pred_check
        _
      $region38: #{tpu_custom_call.1} parent=5 // pred_check_branch
        %258 = sbr.rel (%p255) target = $region40
      $region39: #{tpu_custom_call.1} parent=5 // pred_region
        %s259 = ssub.s32 %s18, 1
        %s260 = sand.u32 %s45, 1
        %s261 = scalar_lea.sflag [#allocation4], %s260
        %s262 = sand.u32 %s45, 1
        %s263 = smul.addr %s262, 16
        %s264 = scalar_lea.vmem [#allocation3], %s263
        // Predicated region
        $region41: #{tpu_custom_call.1} parent=39 // pred_check
          %p265 = pneg %p58
        $region42: #{tpu_custom_call.1} parent=39 // pred_check_branch
          %267 = sbr.rel (%p265) target = $region44
        $region43: #{tpu_custom_call.1} parent=39 // pred_region
          %268 = dma.done %s261, 256
        $region44: #{tpu_custom_call.1} parent=39 // pred_fallthru
          _
        %s269 = sand.u32 %s23, 1
        %s270 = scalar_lea.sflag [#allocation7], %s269
        %s271 = sand.u32 %s71, 1
        %s272 = smul.addr %s271, 256
        %s273 = scalar_lea.vmem [#allocation6], %s272
        // Predicated region
        $region45: #{tpu_custom_call.1} parent=39 // pred_check
          %p274 = pneg %p84
        $region46: #{tpu_custom_call.1} parent=39 // pred_check_branch
          %276 = sbr.rel (%p274) target = $region48
        $region47: #{tpu_custom_call.1} parent=39 // pred_region
          %277 = dma.done %s270, 4096
        $region48: #{tpu_custom_call.1} parent=39 // pred_fallthru
          _
        // Predicated region
        $region49: #{tpu_custom_call.1} parent=39 // pred_check
          %p278 = pneg %p126
        $region50: #{tpu_custom_call.1} parent=39 // pred_check_branch
          %280 = sbr.rel (%p278) target = $region52
        $region51: #{tpu_custom_call.1} parent=39 // pred_region
          %281 = dma.done [#allocation7], 1024
        $region52: #{tpu_custom_call.1} parent=39 // pred_fallthru
          _
        %s282 = sand.u32 %s45, 1
        %s283 = scalar_lea.sflag [#allocation4], %s282
        %s284 = sand.u32 %s45, 1
        %s285 = smul.addr %s284, 16
        %s286 = scalar_lea.vmem [#allocation3], %s285
        %p287 = pneg %p58
        %p288 = pneg %p55
        %s289 = sand.u32 %s23, 1
        %s290 = scalar_lea.sflag [#allocation7], %s289
        %s291 = sand.u32 %s71, 1
        %s292 = smul.addr %s291, 256
        %s293 = scalar_lea.vmem [#allocation6], %s292
        %p294 = pneg %p84
        %p295 = pneg %p81
        %p296 = pneg %p105
        %p297 = pneg %p102
        %p298 = pneg %p126
        %p299 = pneg %p123
        %p300 = pneg %p147
        %p301 = pneg %p144
        %p302 = pneg %p173
        %p303 = pneg %p170
        %s304 = smul.u32 4, %s28
        %s305 = smul.u32 64, %s28
        %p307 = scmp.eq.s32.totalorder %s28, 0
        // Predicated region
        $region53: #{tpu_custom_call.1} parent=39 // pred_check
          %p308 = pneg %p307
        $region54: #{tpu_custom_call.1} parent=39 // pred_check_branch
          %310 = sbr.rel (%p308) target = $region56
        $region55: #{tpu_custom_call.1} parent=39 // pred_region
          %311 = vst [vmem:[#allocation2] sm:$0xff] 0.0
        $region56: #{tpu_custom_call.1} parent=39 // pred_fallthru
          _
        %v312 = vld [vmem:[#allocation2] sm:$0xff]
        %v313 = vld [vmem:[%s264] sm:$0xff]
        %v314 = vld [vmem:[%s264 + $0x8] sm:$0xff]
        %v315 = vld [vmem:[%s273] sm:$0xf]
        %v316 = vld [vmem:[%s273 + $0x4] sm:$0xf]
        %v317 = vld [vmem:[%s273 + $0x8] sm:$0xf]
        %v318 = vld [vmem:[%s273 + $0xc] sm:$0xf]
        %v319 = vld [vmem:[%s273 + $0x10] sm:$0xf]
        %v320 = vld [vmem:[%s273 + $0x14] sm:$0xf]
        %v321 = vld [vmem:[%s273 + $0x18] sm:$0xf]
        %v322 = vld [vmem:[%s273 + $0x1c] sm:$0xf]
        %v323 = vld [vmem:[%s273 + $0x20] sm:$0xf]
        %v324 = vld [vmem:[%s273 + $0x24] sm:$0xf]
        %v325 = vld [vmem:[%s273 + $0x28] sm:$0xf]
        %v326 = vld [vmem:[%s273 + $0x2c] sm:$0xf]
        %v327 = vld [vmem:[%s273 + $0x30] sm:$0xf]
        %v328 = vld [vmem:[%s273 + $0x34] sm:$0xf]
        %v329 = vld [vmem:[%s273 + $0x38] sm:$0xf]
        %v330 = vld [vmem:[%s273 + $0x3c] sm:$0xf]
        %v331 = vld [vmem:[%s273 + $0x40] sm:$0xf]
        %v332 = vld [vmem:[%s273 + $0x44] sm:$0xf]
        %v333 = vld [vmem:[%s273 + $0x48] sm:$0xf]
        %v334 = vld [vmem:[%s273 + $0x4c] sm:$0xf]
        %v335 = vld [vmem:[%s273 + $0x50] sm:$0xf]
        %v336 = vld [vmem:[%s273 + $0x54] sm:$0xf]
        %v337 = vld [vmem:[%s273 + $0x58] sm:$0xf]
        %v338 = vld [vmem:[%s273 + $0x5c] sm:$0xf]
        %v339 = vld [vmem:[%s273 + $0x60] sm:$0xf]
        %v340 = vld [vmem:[%s273 + $0x64] sm:$0xf]
        %v341 = vld [vmem:[%s273 + $0x68] sm:$0xf]
        %v342 = vld [vmem:[%s273 + $0x6c] sm:$0xf]
        %v343 = vld [vmem:[%s273 + $0x70] sm:$0xf]
        %v344 = vld [vmem:[%s273 + $0x74] sm:$0xf]
        %v345 = vld [vmem:[%s273 + $0x78] sm:$0xf]
        %v346 = vld [vmem:[%s273 + $0x7c] sm:$0xf]
        %v347 = vld [vmem:[%s273 + $0x80] sm:$0xf]
        %v348 = vld [vmem:[%s273 + $0x84] sm:$0xf]
        %v349 = vld [vmem:[%s273 + $0x88] sm:$0xf]
        %v350 = vld [vmem:[%s273 + $0x8c] sm:$0xf]
        %v351 = vld [vmem:[%s273 + $0x90] sm:$0xf]
        %v352 = vld [vmem:[%s273 + $0x94] sm:$0xf]
        %v353 = vld [vmem:[%s273 + $0x98] sm:$0xf]
        %v354 = vld [vmem:[%s273 + $0x9c] sm:$0xf]
        %v355 = vld [vmem:[%s273 + $0xa0] sm:$0xf]
        %v356 = vld [vmem:[%s273 + $0xa4] sm:$0xf]
        %v357 = vld [vmem:[%s273 + $0xa8] sm:$0xf]
        %v358 = vld [vmem:[%s273 + $0xac] sm:$0xf]
        %v359 = vld [vmem:[%s273 + $0xb0] sm:$0xf]
        %v360 = vld [vmem:[%s273 + $0xb4] sm:$0xf]
        %v361 = vld [vmem:[%s273 + $0xb8] sm:$0xf]
        %v362 = vld [vmem:[%s273 + $0xbc] sm:$0xf]
        %v363 = vld [vmem:[%s273 + $0xc0] sm:$0xf]
        %v364 = vld [vmem:[%s273 + $0xc4] sm:$0xf]
        %v365 = vld [vmem:[%s273 + $0xc8] sm:$0xf]
        %v366 = vld [vmem:[%s273 + $0xcc] sm:$0xf]
        %v367 = vld [vmem:[%s273 + $0xd0] sm:$0xf]
        %v368 = vld [vmem:[%s273 + $0xd4] sm:$0xf]
        %v369 = vld [vmem:[%s273 + $0xd8] sm:$0xf]
        %v370 = vld [vmem:[%s273 + $0xdc] sm:$0xf]
        %v371 = vld [vmem:[%s273 + $0xe0] sm:$0xf]
        %v372 = vld [vmem:[%s273 + $0xe4] sm:$0xf]
        %v373 = vld [vmem:[%s273 + $0xe8] sm:$0xf]
        %v374 = vld [vmem:[%s273 + $0xec] sm:$0xf]
        %v375 = vld [vmem:[%s273 + $0xf0] sm:$0xf]
        %v376 = vld [vmem:[%s273 + $0xf4] sm:$0xf]
        %v377 = vld [vmem:[%s273 + $0xf8] sm:$0xf]
        %v378 = vld [vmem:[%s273 + $0xfc] sm:$0xf]
        %v381 = vunpack.c.l.b16 %v313
        %v382 = vunpack.c.h.b16 %v313
        %v383 = vunpack.c.l.b16 %v314
        %v384 = vunpack.c.h.b16 %v314
        %v385 = vpack.c.b16 %v381, %v381
        %v386 = vpack.c.b16 %v382, %v382
        %v387 = vpack.c.b16 %v383, %v383
        %v388 = vpack.c.b16 %v384, %v384
        %v457 = vunpack.c.l.b16 %v315
        %v458 = vunpack.c.l.b16 %v316
        %v459 = vunpack.c.l.b16 %v317
        %v460 = vunpack.c.l.b16 %v318
        %v461 = vunpack.c.l.b16 %v319
        %v462 = vunpack.c.l.b16 %v320
        %v463 = vunpack.c.l.b16 %v321
        %v464 = vunpack.c.l.b16 %v322
        %v465 = vunpack.c.l.b16 %v323
        %v466 = vunpack.c.l.b16 %v324
        %v467 = vunpack.c.l.b16 %v325
        %v468 = vunpack.c.l.b16 %v326
        %v469 = vunpack.c.l.b16 %v327
        %v470 = vunpack.c.l.b16 %v328
        %v471 = vunpack.c.l.b16 %v329
        %v472 = vunpack.c.l.b16 %v330
        %v473 = vunpack.c.l.b16 %v331
        %v474 = vunpack.c.l.b16 %v332
        %v475 = vunpack.c.l.b16 %v333
        %v476 = vunpack.c.l.b16 %v334
        %v477 = vunpack.c.l.b16 %v335
        %v478 = vunpack.c.l.b16 %v336
        %v479 = vunpack.c.l.b16 %v337
        %v480 = vunpack.c.l.b16 %v338
        %v481 = vunpack.c.l.b16 %v339
        %v482 = vunpack.c.l.b16 %v340
        %v483 = vunpack.c.l.b16 %v341
        %v484 = vunpack.c.l.b16 %v342
        %v485 = vunpack.c.l.b16 %v343
        %v486 = vunpack.c.l.b16 %v344
        %v487 = vunpack.c.l.b16 %v345
        %v488 = vunpack.c.l.b16 %v346
        %v489 = vunpack.c.l.b16 %v347
        %v490 = vunpack.c.l.b16 %v348
        %v491 = vunpack.c.l.b16 %v349
        %v492 = vunpack.c.l.b16 %v350
        %v493 = vunpack.c.l.b16 %v351
        %v494 = vunpack.c.l.b16 %v352
        %v495 = vunpack.c.l.b16 %v353
        %v496 = vunpack.c.l.b16 %v354
        %v497 = vunpack.c.l.b16 %v355
        %v498 = vunpack.c.l.b16 %v356
        %v499 = vunpack.c.l.b16 %v357
        %v500 = vunpack.c.l.b16 %v358
        %v501 = vunpack.c.l.b16 %v359
        %v502 = vunpack.c.l.b16 %v360
        %v503 = vunpack.c.l.b16 %v361
        %v504 = vunpack.c.l.b16 %v362
        %v505 = vunpack.c.l.b16 %v363
        %v506 = vunpack.c.l.b16 %v364
        %v507 = vunpack.c.l.b16 %v365
        %v508 = vunpack.c.l.b16 %v366
        %v509 = vunpack.c.l.b16 %v367
        %v510 = vunpack.c.l.b16 %v368
        %v511 = vunpack.c.l.b16 %v369
        %v512 = vunpack.c.l.b16 %v370
        %v513 = vunpack.c.l.b16 %v371
        %v514 = vunpack.c.l.b16 %v372
        %v515 = vunpack.c.l.b16 %v373
        %v516 = vunpack.c.l.b16 %v374
        %v517 = vunpack.c.l.b16 %v375
        %v518 = vunpack.c.l.b16 %v376
        %v519 = vunpack.c.l.b16 %v377
        %v520 = vunpack.c.l.b16 %v378
        %v521 = vpack.c.b16 %v458, %v457
        %v522 = vpack.c.b16 %v460, %v459
        %v523 = vpack.c.b16 %v462, %v461
        %v524 = vpack.c.b16 %v464, %v463
        %v525 = vpack.c.b16 %v466, %v465
        %v526 = vpack.c.b16 %v468, %v467
        %v527 = vpack.c.b16 %v470, %v469
        %v528 = vpack.c.b16 %v472, %v471
        %v529 = vpack.c.b16 %v474, %v473
        %v530 = vpack.c.b16 %v476, %v475
        %v531 = vpack.c.b16 %v478, %v477
        %v532 = vpack.c.b16 %v480, %v479
        %v533 = vpack.c.b16 %v482, %v481
        %v534 = vpack.c.b16 %v484, %v483
        %v535 = vpack.c.b16 %v486, %v485
        %v536 = vpack.c.b16 %v488, %v487
        %v537 = vpack.c.b16 %v490, %v489
        %v538 = vpack.c.b16 %v492, %v491
        %v539 = vpack.c.b16 %v494, %v493
        %v540 = vpack.c.b16 %v496, %v495
        %v541 = vpack.c.b16 %v498, %v497
        %v542 = vpack.c.b16 %v500, %v499
        %v543 = vpack.c.b16 %v502, %v501
        %v544 = vpack.c.b16 %v504, %v503
        %v545 = vpack.c.b16 %v506, %v505
        %v546 = vpack.c.b16 %v508, %v507
        %v547 = vpack.c.b16 %v510, %v509
        %v548 = vpack.c.b16 %v512, %v511
        %v549 = vpack.c.b16 %v514, %v513
        %v550 = vpack.c.b16 %v516, %v515
        %v551 = vpack.c.b16 %v518, %v517
        %v552 = vpack.c.b16 %v520, %v519
        %585 = vmatprep.subr.bf16.mxu0 0
        %586 = vmatpush1.bf16.msra.mxu0 %v521
        %587 = vmatprep.subr.bf16.mxu0 0
        %588 = vmatpush1.bf16.msra.mxu0 %v522
        %589 = vmatprep.subr.bf16.mxu0 0
        %590 = vmatpush1.bf16.msra.mxu0 %v523
        %591 = vmatprep.subr.bf16.mxu0 0
        %592 = vmatpush1.bf16.msra.mxu0 %v524
        %593 = vmatprep.subr.bf16.mxu0 0
        %594 = vmatpush1.bf16.msra.mxu0 %v525
        %595 = vmatprep.subr.bf16.mxu0 0
        %596 = vmatpush1.bf16.msra.mxu0 %v526
        %597 = vmatprep.subr.bf16.mxu0 0
        %598 = vmatpush1.bf16.msra.mxu0 %v527
        %599 = vmatprep.subr.bf16.mxu0 0
        %600 = vmatpush1.bf16.msra.mxu0 %v528
        %601 = vmatprep.subr.bf16.mxu0 0
        %602 = vmatpush1.bf16.msra.mxu0 %v529
        %603 = vmatprep.subr.bf16.mxu0 0
        %604 = vmatpush1.bf16.msra.mxu0 %v530
        %605 = vmatprep.subr.bf16.mxu0 0
        %606 = vmatpush1.bf16.msra.mxu0 %v531
        %607 = vmatprep.subr.bf16.mxu0 0
        %608 = vmatpush1.bf16.msra.mxu0 %v532
        %609 = vmatprep.subr.bf16.mxu0 0
        %610 = vmatpush1.bf16.msra.mxu0 %v533
        %611 = vmatprep.subr.bf16.mxu0 0
        %612 = vmatpush1.bf16.msra.mxu0 %v534
        %613 = vmatprep.subr.bf16.mxu0 0
        %614 = vmatpush1.bf16.msra.mxu0 %v535
        %615 = vmatprep.subr.bf16.mxu0 0
        %616 = vmatpush1.bf16.msra.mxu0 %v536
        %617 = vmatprep.mubr.bf16.mxu0 %v386
        %618 = vmatmul.mubr.bf16.gmra.mrb[0].mxu0 %v385
        %v619 = vpop.f32.mrb[0].mxu0
        %v620 = vadd.f32 0.0, %v619
        %v621 = vpop.f32.mrb[0].mxu0
        %v622 = vpop.f32.mrb[0].mxu0
        %v623 = vpop.f32.mrb[0].mxu0
        %624 = vdwg.mxu0
        %625 = vmatprep.subr.bf16.mxu0 0
        %626 = vmatpush1.bf16.msra.mxu0 %v537
        %627 = vmatprep.subr.bf16.mxu0 0
        %628 = vmatpush1.bf16.msra.mxu0 %v538
        %629 = vmatprep.subr.bf16.mxu0 0
        %630 = vmatpush1.bf16.msra.mxu0 %v539
        %631 = vmatprep.subr.bf16.mxu0 0
        %632 = vmatpush1.bf16.msra.mxu0 %v540
        %633 = vmatprep.subr.bf16.mxu0 0
        %634 = vmatpush1.bf16.msra.mxu0 %v541
        %635 = vmatprep.subr.bf16.mxu0 0
        %636 = vmatpush1.bf16.msra.mxu0 %v542
        %637 = vmatprep.subr.bf16.mxu0 0
        %638 = vmatpush1.bf16.msra.mxu0 %v543
        %639 = vmatprep.subr.bf16.mxu0 0
        %640 = vmatpush1.bf16.msra.mxu0 %v544
        %641 = vmatprep.subr.bf16.mxu0 0
        %642 = vmatpush1.bf16.msra.mxu0 %v545
        %643 = vmatprep.subr.bf16.mxu0 0
        %644 = vmatpush1.bf16.msra.mxu0 %v546
        %645 = vmatprep.subr.bf16.mxu0 0
        %646 = vmatpush1.bf16.msra.mxu0 %v547
        %647 = vmatprep.subr.bf16.mxu0 0
        %648 = vmatpush1.bf16.msra.mxu0 %v548
        %649 = vmatprep.subr.bf16.mxu0 0
        %650 = vmatpush1.bf16.msra.mxu0 %v549
        %651 = vmatprep.subr.bf16.mxu0 0
        %652 = vmatpush1.bf16.msra.mxu0 %v550
        %653 = vmatprep.subr.bf16.mxu0 0
        %654 = vmatpush1.bf16.msra.mxu0 %v551
        %655 = vmatprep.subr.bf16.mxu0 0
        %656 = vmatpush1.bf16.msra.mxu0 %v552
        %657 = vmatprep.mubr.bf16.mxu0 %v388
        %658 = vmatmul.mubr.bf16.gmra.mrb[0].mxu0 %v387
        %v659 = vpop.f32.mrb[0].mxu0
        %v660 = vadd.f32 %v620, %v659
        %v661 = vpop.f32.mrb[0].mxu0
        %v662 = vpop.f32.mrb[0].mxu0
        %v663 = vpop.f32.mrb[0].mxu0
        %664 = vdwg.mxu0
        %v665 = vadd.f32 %v312, %v660
        %666 = vst [vmem:[#allocation2] sm:$0xff] %v665
        %p667 = scmp.eq.s32.totalorder %s28, 1
        // Predicated region
        $region57: #{tpu_custom_call.1} parent=39 // pred_check
          %p668 = pneg %p667
        $region58: #{tpu_custom_call.1} parent=39 // pred_check_branch
          %670 = sbr.rel (%p668) target = $region60
        $region59: #{tpu_custom_call.1} parent=39 // pred_region
          %v671 = vld [vmem:[#allocation2] sm:$0xff]
          %v672 = vld [vmem:[%s2] sm:$0x1]
          %v674 = vlaneseq
          %v675 = vshrl.u32 %v674, 7
          %v676 = vsub.s32 0, %v675
          %v677 = vrot.slane %v672, %v676
          %v679 = vadd.f32 %v671, %v677
          %v680 = vmax.f32 %v679, 0.0
          %v681 = vpack.c.bf16 %v680, %v680
          %v682 = vld [vmem:[#allocation8] sm:$0xf]
          %v683 = vld [vmem:[#allocation8 + $0x4] sm:$0xf]
          %v684 = vld [vmem:[#allocation8 + $0x8] sm:$0xf]
          %v685 = vld [vmem:[#allocation8 + $0xc] sm:$0xf]
          %v686 = vld [vmem:[#allocation8 + $0x10] sm:$0xf]
          %v687 = vld [vmem:[#allocation8 + $0x14] sm:$0xf]
          %v688 = vld [vmem:[#allocation8 + $0x18] sm:$0xf]
          %v689 = vld [vmem:[#allocation8 + $0x1c] sm:$0xf]
          %v690 = vld [vmem:[#allocation8 + $0x20] sm:$0xf]
          %v691 = vld [vmem:[#allocation8 + $0x24] sm:$0xf]
          %v692 = vld [vmem:[#allocation8 + $0x28] sm:$0xf]
          %v693 = vld [vmem:[#allocation8 + $0x2c] sm:$0xf]
          %v694 = vld [vmem:[#allocation8 + $0x30] sm:$0xf]
          %v695 = vld [vmem:[#allocation8 + $0x34] sm:$0xf]
          %v696 = vld [vmem:[#allocation8 + $0x38] sm:$0xf]
          %v697 = vld [vmem:[#allocation8 + $0x3c] sm:$0xf]
          %v698 = vld [vmem:[%s4] sm:$0x1]
          %v700 = vlaneseq
          %v701 = vshrl.u32 %v700, 7
          %v702 = vsub.s32 0, %v701
          %v703 = vrot.slane %v698, %v702
          %v721 = vunpack.c.l.b16 %v682
          %v722 = vunpack.c.l.b16 %v683
          %v723 = vunpack.c.l.b16 %v684
          %v724 = vunpack.c.l.b16 %v685
          %v725 = vunpack.c.l.b16 %v686
          %v726 = vunpack.c.l.b16 %v687
          %v727 = vunpack.c.l.b16 %v688
          %v728 = vunpack.c.l.b16 %v689
          %v729 = vunpack.c.l.b16 %v690
          %v730 = vunpack.c.l.b16 %v691
          %v731 = vunpack.c.l.b16 %v692
          %v732 = vunpack.c.l.b16 %v693
          %v733 = vunpack.c.l.b16 %v694
          %v734 = vunpack.c.l.b16 %v695
          %v735 = vunpack.c.l.b16 %v696
          %v736 = vunpack.c.l.b16 %v697
          %v737 = vpack.c.b16 %v722, %v721
          %v738 = vpack.c.b16 %v724, %v723
          %v739 = vpack.c.b16 %v726, %v725
          %v740 = vpack.c.b16 %v728, %v727
          %v741 = vpack.c.b16 %v730, %v729
          %v742 = vpack.c.b16 %v732, %v731
          %v743 = vpack.c.b16 %v734, %v733
          %v744 = vpack.c.b16 %v736, %v735
          %753 = vmatprep.subr.bf16.mxu0 0
          %754 = vmatpush1.bf16.msra.mxu0 %v737
          %755 = vmatprep.subr.bf16.mxu0 0
          %756 = vmatpush1.bf16.msra.mxu0 %v738
          %757 = vmatprep.subr.bf16.mxu0 0
          %758 = vmatpush1.bf16.msra.mxu0 %v739
          %759 = vmatprep.subr.bf16.mxu0 0
          %760 = vmatpush1.bf16.msra.mxu0 %v740
          %761 = vmatprep.subr.bf16.mxu0 0
          %762 = vmatpush1.bf16.msra.mxu0 %v741
          %763 = vmatprep.subr.bf16.mxu0 0
          %764 = vmatpush1.bf16.msra.mxu0 %v742
          %765 = vmatprep.subr.bf16.mxu0 0
          %766 = vmatpush1.bf16.msra.mxu0 %v743
          %767 = vmatprep.subr.bf16.mxu0 0
          %768 = vmatpush1.bf16.msra.mxu0 %v744
          %769 = vmatprep.subr.bf16.mxu0 0
          %770 = vmatpush1.bf16.msra.mxu0 0
          %771 = vmatprep.subr.bf16.mxu0 0
          %772 = vmatpush1.bf16.msra.mxu0 0
          %773 = vmatprep.subr.bf16.mxu0 0
          %774 = vmatpush1.bf16.msra.mxu0 0
          %775 = vmatprep.subr.bf16.mxu0 0
          %776 = vmatpush1.bf16.msra.mxu0 0
          %777 = vmatprep.subr.bf16.mxu0 0
          %778 = vmatpush1.bf16.msra.mxu0 0
          %779 = vmatprep.subr.bf16.mxu0 0
          %780 = vmatpush1.bf16.msra.mxu0 0
          %781 = vmatprep.subr.bf16.mxu0 0
          %782 = vmatpush1.bf16.msra.mxu0 0
          %783 = vmatprep.subr.bf16.mxu0 0
          %784 = vmatpush1.bf16.msra.mxu0 0
          %785 = vmatprep.mubr.bf16.mxu0 0
          %786 = vmatmul.mubr.bf16.gmra.mrb[0].mxu0 %v681
          %v787 = vpop.f32.mrb[0].mxu0
          %v788 = vadd.f32 %v703, %v787
          %v789 = vpop.f32.mrb[0].mxu0
          %v790 = vpop.f32.mrb[0].mxu0
          %v791 = vpop.f32.mrb[0].mxu0
          %792 = vdwg.mxu0
          %793 = vst [vmem:[#allocation9] sm:$0xff] %v788
        $region60: #{tpu_custom_call.1} parent=39 // pred_fallthru
          _
        // Predicated region
        $region61: #{tpu_custom_call.1} parent=39 // pred_check
          %p794 = pneg %p170
        $region62: #{tpu_custom_call.1} parent=39 // pred_check_branch
          %796 = sbr.rel (%p794) target = $region64
        $region63: #{tpu_custom_call.1} parent=39 // pred_region
          %s798 = ssub.s32 128, 128
          %799 = vsyncadd [#allocation5], %s798
          %s800 = smul.addr %s27, 128
          %s801 = scalar_lea.hbm %s5, %s800
          %s803 = sshll.u32 [#allocation9], 4
          %s804 = int_to_ptr.vmem [resolvable:$true] %s803
          %806 = dma.vmem_to_hbm [thread:$0]  %s804, 128, %s801, [#allocation5]
        $region64: #{tpu_custom_call.1} parent=39 // pred_fallthru
          _
        // Predicated region
        $region65: #{tpu_custom_call.1} parent=39 // pred_check
          %p807 = pneg %p170
        $region66: #{tpu_custom_call.1} parent=39 // pred_check_branch
          %809 = sbr.rel (%p807) target = $region68
        $region67: #{tpu_custom_call.1} parent=39 // pred_region
          %810 = dma.done [#allocation5], 128
        $region68: #{tpu_custom_call.1} parent=39 // pred_fallthru
          _
      $region40: #{tpu_custom_call.1} parent=5 // pred_fallthru
        _
      %p811 = scmp.le.s32.totalorder 2, %s18
      // Predicated region
      $region69: #{tpu_custom_call.1} parent=5 // pred_check
        %p812 = pneg %p811
      $region70: #{tpu_custom_call.1} parent=5 // pred_check_branch
        %814 = sbr.rel (%p812) target = $region72
      $region71: #{tpu_custom_call.1} parent=5 // pred_region
        %s815 = ssub.s32 %s18, 2
      $region72: #{tpu_custom_call.1} parent=5 // pred_fallthru
        _
    $region6: #{tpu_custom_call.1} parent=1 // loop_footer
      %s22 = sadd.s32 1, %s18
    $region7: #{tpu_custom_call.1} parent=1 // loop_footer_branch
      %17 = sbr.rel target = $region3
    $region8: #{tpu_custom_call.1} parent=1 // loop_exit
      _
    %816 = vsyncpa [#allocation4], 1
    %s817 = scalar_lea.sflag [#allocation4], 1
    %818 = vsyncpa %s817, 1
    %819 = vsyncpa [#allocation7], 1
    %s820 = scalar_lea.sflag [#allocation7], 1
    %821 = vsyncpa %s820, 1
    %822 = vsyncpa [#allocation5], 1
    %s823 = scalar_lea.sflag [#allocation5], 1
    %824 = vsyncpa %s823, 1

</llo_original>
